<compile_context>
chip_gen: v5e
topology: v5e:2x2
jax: 0.10.0
libtpu: 0.0.40
codegen_flags: <defaults>
</compile_context>

<pallas_src>
import functools

import jax
import jax.numpy as jnp
import numpy as np
from jax.experimental import pallas as pl
from jax.experimental.pallas import tpu as pltpu


def _round_up(x, m):
    return ((x + m - 1) // m) * m


def hexblock_kernel(xm_ref, xh_ref, pm_ref, wm_ref, b_ref, o_ref, *, residual, Wp):
    """Fused hex-conv(kernel_size=1) + bias + (optional) residual + ReLU for one lane tile.

    xm_ref : VMEM (Cin_pad, T)   f32  -- current lane tile of the folded, padded plane
    xh_ref : VMEM (Cin_pad, Hb)  f32  -- right halo (next Hb lanes of the same array)
    pm_ref : VMEM (1, T)         f32  -- parity mask (1.0 where the original column is even)
    wm_ref : VMEM (Cout_pad, 7*Cin_pad) bf16 -- weights, tap-major (see wrapper)
    b_ref  : VMEM (Cout_pad, 1)  f32  -- bias
    o_ref  : VMEM (Cout_pad, T)  f32  -- lane-dense output tile
    """
    T = o_ref.shape[1]
    HEAD = Wp + 1

    # Window = tile + halo; both pieces are 128-lane aligned, so the concat is cheap and all
    # tap slices below are STATIC lane slices of this value.
    win = jnp.concatenate([xm_ref[...], xh_ref[...]], axis=1)   # (Cin_pad, T + Hb) f32

    def tap(dr, dc):
        off = HEAD + dr * Wp + dc          # static Python int in [0, 2*HEAD]
        return win[:, off:off + T]         # (Cin_pad, T) f32

    # 9 distinct taps (deduplicated): dr in {-1,0,1} for dc in {-1,0,+1}.
    centre = {dr: tap(dr, 0) for dr in (-1, 0, 1)}
    side = {(dr, dc): tap(dr, dc) for dr in (-1, 0, 1) for dc in (-1, 1)}

    is_even = pm_ref[...] != 0.0           # (1, T) bool, broadcasts over channels

    rows = [centre[-1], centre[0], centre[1]]                    # centre column taps
    for dc in (-1, 1):                                           # side columns c-1 / c+1
        for j in range(2):
            # even output column -> rows r, r+1 (dr=j); odd -> rows r-1, r (dr=j-1)
            rows.append(jnp.where(is_even, side[(j, dc)], side[(j - 1, dc)]))

    # im2col (7*Cin_pad, T): parity blend done in f32, single cast to bf16 for the MXU.
    x_im2col = jnp.concatenate(rows, axis=0).astype(jnp.bfloat16)

    # One MXU matmul (bf16 operands, f32 accumulate) does all 7*Cin*Cout MACs per pixel.
    acc = jnp.dot(wm_ref[...], x_im2col, preferred_element_type=jnp.float32)  # (Cout_pad, T)

    acc = acc + b_ref[...]                 # bias stays on the f32 path
    if residual:
        acc = acc + centre[0]              # f32 centre tap == x itself (Cin_pad == Cout_pad)

    o_ref[...] = jnp.maximum(acc, 0.0).astype(o_ref.dtype)


def hex_block_forward(x, w0, w1, bias, *, residual=True):
    """x: (N, Cin, H, W) f32; w0: (3, Cin, Cout); w1: (2, 2, Cin, Cout); bias: (Cout,)."""
    N, Cin, H, W = x.shape
    Cout = bias.shape[0]
    if residual:
        assert Cin == Cout, "residual add requires in_channels == out_channels"

    Hp, Wp = H + 2, W + 2
    plane = Hp * Wp
    HEAD = Wp + 1                                    # max backward stencil reach (lanes)
    Hb = _round_up(2 * HEAD, 128)                    # halo block width (lane aligned)
    Lp = _round_up(plane, Hb)                        # per-item lane stride
    lanes_total = N * Lp                             # folded output lane count (mult of Hb)

    Cin_pad = _round_up(Cin, 8)
    Cout_pad = _round_up(Cout, 8)
    K = 7 * Cin_pad

    # ---- lane tile size: ~2 MiB f32 im2col temp per tile, multiple of Hb, divides total ----
    t_budget = max((2 * 1024 * 1024) // (4 * K), 1)
    target_T = max(Hb, min(2048, _round_up(t_budget, Hb)))
    units = lanes_total // Hb
    nt = max(1, -(-lanes_total // target_T))
    if units >= 2:
        nt = max(nt, 2)                              # keep >=2 grid steps for v7x megacore
    while units % nt:
        nt += 1
    T = lanes_total // nt                            # multiple of Hb (hence of 128)
    Ltot = lanes_total + Hb                          # input lanes incl. trailing halo block

    # ---- input layout: (Cin_pad, Ltot) f32, batch folded into lanes -----------------------
    # Item n's zero-padded (Hp, Wp) plane is flattened and placed at lane HEAD + n*Lp + p;
    # output lane o = n*Lp + p is the conv result at plane position p of item n.
    xt = jnp.transpose(x, (1, 0, 2, 3))                                     # (Cin, N, H, W)
    xt = jnp.pad(xt, ((0, Cin_pad - Cin), (0, 0), (1, 1), (1, 1)))          # chan + spatial pad
    xt = xt.reshape(Cin_pad, N, plane)
    xt = jnp.pad(xt, ((0, 0), (0, 0), (0, Lp - plane)))                     # per-item stride
    xf = jnp.pad(xt.reshape(Cin_pad, lanes_total),
                 ((0, 0), (HEAD, Ltot - lanes_total - HEAD)))               # global guards
    # TODO(synk): these pad/reshape passes (and the final crop below) are pure layout; fold
    #             them into the producer/consumer or a halo-aware manual-DMA scheme to save
    #             the extra HBM passes that matter most on v5e/v6e.

    # ---- weights (Cout_pad, 7*Cin_pad) bf16, tap-major order matching the kernel ----------
    # Tap order: centre dr=-1,0,+1 then (dc=-1, j=0,1), (dc=+1, j=0,1).
    w_stack = jnp.concatenate([w0, w1[:, 0], w1[:, 1]], axis=0)             # (7, Cin, Cout)
    w_stack = jnp.pad(w_stack, ((0, 0), (0, Cin_pad - Cin), (0, 0)))        # (7, Cin_pad, Cout)
    wm = jnp.transpose(w_stack, (2, 0, 1)).reshape(Cout, K)                 # Wm[co, t*Cin_pad+ci]
    wm = jnp.pad(wm, ((0, Cout_pad - Cout), (0, 0))).astype(jnp.bfloat16)
    b2d = jnp.pad(bias.reshape(Cout, 1).astype(jnp.float32),
                  ((0, Cout_pad - Cout), (0, 0)))

    # ---- parity mask (embedded constant): 1.0 where original column index is even ---------
    o_lane = np.arange(lanes_total)
    q = (o_lane % Lp) % Wp                              # padded column index
    pmask = jnp.asarray(((q % 2) == 1).astype(np.float32)[None, :])         # (1, lanes_total)

    kernel = functools.partial(hexblock_kernel, residual=residual, Wp=Wp)

    flops = 2 * Cout_pad * K * lanes_total
    bytes_accessed = (4 * xf.size + 2 * wm.size + 4 * b2d.size + 4 * pmask.size
                      + 4 * Cout_pad * lanes_total)

    out_flat = pl.pallas_call(
        kernel,
        out_shape=jax.ShapeDtypeStruct((Cout_pad, lanes_total), jnp.float32),
        grid=(nt,),
        in_specs=[
            pl.BlockSpec((Cin_pad, T), lambda t: (0, t)),                    # current lane tile
            pl.BlockSpec((Cin_pad, Hb), lambda t: (0, (t + 1) * (T // Hb))),  # right halo
            pl.BlockSpec((1, T), lambda t: (0, t)),                          # parity mask tile
            pl.BlockSpec((Cout_pad, K), lambda t: (0, 0)),                   # weights (resident)
            pl.BlockSpec((Cout_pad, 1), lambda t: (0, 0)),                   # bias (resident)
        ],
        out_specs=pl.BlockSpec((Cout_pad, T), lambda t: (0, t)),             # lane-dense store
        compiler_params=pltpu.CompilerParams(
            dimension_semantics=("parallel",),
            vmem_limit_bytes=64 * 1024 * 1024),
        cost_estimate=pl.CostEstimate(flops=flops, transcendentals=0,
                                      bytes_accessed=bytes_accessed),
    )(xf, xf, pmask, wm, b2d)

    # Strip pad channels / junk lanes and restore NCHW (pure layout plumbing).
    out = out_flat[:Cout].reshape(Cout, N, Lp)[:, :, :plane]
    out = out.reshape(Cout, N, Hp, Wp)[:, :, 1:1 + H, 1:1 + W]
    return jnp.transpose(out, (1, 0, 2, 3)).astype(x.dtype)


def hex_block_reference(x, w0, w1, bias, *, residual=True):
    """Pure-JAX (f32) reference of the same semantics (for verification)."""
    N, Cin, H, W = x.shape
    Cout = bias.shape[0]
    xpad = jnp.pad(x, ((0, 0), (0, 0), (1, 1), (1, 1)))

    def win(dr, dc):
        return xpad[:, :, 1 + dr:1 + dr + H, 1 + dc:1 + dc + W]  # (N, Cin, H, W)

    def contract(xs, wmat):  # wmat: (Cin, Cout)
        return jnp.einsum("nihw,io->nohw", xs, wmat)

    acc = jnp.zeros((N, Cout, H, W), jnp.float32) + bias[None, :, None, None]
    for k in range(3):
        acc = acc + contract(win(k - 1, 0), w0[k])
    even = jnp.zeros((N, Cout, H, W), jnp.float32)
    odd = jnp.zeros((N, Cout, H, W), jnp.float32)
    for side, dc in ((0, -1), (1, 1)):
        for j in range(2):
            even = even + contract(win(j, dc), w1[j, side])
            odd = odd + contract(win(j - 1, dc), w1[j, side])
    mask = (jnp.arange(W) % 2 == 0)[None, None, None, :]
    acc = acc + jnp.where(mask, even, odd)
    if residual:
        acc = acc + x
    return jnp.maximum(acc, 0.0)


if __name__ == "__main__":
    key = jax.random.PRNGKey(0)
    N, C, H, W = 2, 4, 16, 16          # in_channels == out_channels (residual block)
    k_x, k_w0, k_w1, k_b = jax.random.split(key, 4)

    x = jax.random.normal(k_x, (N, C, H, W), dtype=jnp.float32)

    # Deterministic parameter init (hexagdly-style uniform, fan_in = Cin * 7 hex cells).
    stdv = 1.0 / np.sqrt(C * 7)
    w0 = jax.random.uniform(k_w0, (3, C, C), minval=-stdv, maxval=stdv, dtype=jnp.float32)
    w1 = jax.random.uniform(k_w1, (2, 2, C, C), minval=-stdv, maxval=stdv, dtype=jnp.float32)
    b = jax.random.uniform(k_b, (C,), minval=-stdv, maxval=stdv, dtype=jnp.float32)

    fwd = jax.jit(functools.partial(hex_block_forward, residual=True))
    out = jax.block_until_ready(fwd(x, w0, w1, b))

    ref = hex_block_reference(x, w0, w1, b, residual=True)
    # Tolerance loosened vs f32 because the matmul operands are bf16 (f32 accumulate).
    np.testing.assert_allclose(np.asarray(out), np.asarray(ref), rtol=2e-2, atol=2e-2)
    print("KERNEL_OK")
</pallas_src>

<mosaic_0001>
module attributes {stable_mosaic.version = 11 : i64} {
  func.func @hexblock_kernel(%arg0: i32, %arg1: memref<8x384xf32, #tpu.memory_space<vmem>>, %arg2: memref<8x128xf32, #tpu.memory_space<vmem>>, %arg3: memref<1x384xf32, #tpu.memory_space<vmem>>, %arg4: memref<8x56xbf16, #tpu.memory_space<vmem>>, %arg5: memref<8x1xf32, #tpu.memory_space<vmem>>, %arg6: memref<8x384xf32, #tpu.memory_space<vmem>>) attributes {dimension_semantics = [#tpu.dimension_semantics<parallel>], iteration_bounds = array<i64: 2>, scalar_prefetch = 0 : i64, scratch_operands = 0 : i64, tpu.core_type = #tpu.core_type<tc>, window_params = [{transform_indices = @transform_0, window_bounds = array<i64: 8, 384>}, {transform_indices = @transform_1, window_bounds = array<i64: 8, 128>}, {transform_indices = @transform_2, window_bounds = array<i64: 1, 384>}, {pipeline_mode = #tpu.pipeline_mode<synchronous>, transform_indices = @transform_3, window_bounds = array<i64: 8, 56>}, {pipeline_mode = #tpu.pipeline_mode<synchronous>, transform_indices = @transform_4, window_bounds = array<i64: 8, 1>}, {transform_indices = @transform_5, window_bounds = array<i64: 8, 384>}]} {
    %c0 = arith.constant 0 : index
    %c0_0 = arith.constant 0 : index
    %0 = vector.load %arg1[%c0, %c0_0] : memref<8x384xf32, #tpu.memory_space<vmem>>, vector<8x384xf32>
    %c0_1 = arith.constant 0 : index
    %c0_2 = arith.constant 0 : index
    %1 = vector.load %arg2[%c0_1, %c0_2] : memref<8x128xf32, #tpu.memory_space<vmem>>, vector<8x128xf32>
    %2 = tpu.concatenate %0, %1 in 1 : vector<8x384xf32>, vector<8x128xf32> -> vector<8x512xf32>
    %3 = vector.extract_strided_slice %2 {offsets = [0, 1], sizes = [8, 384], strides = [1, 1]} : vector<8x512xf32> to vector<8x384xf32>
    %4 = vector.extract_strided_slice %2 {offsets = [0, 19], sizes = [8, 384], strides = [1, 1]} : vector<8x512xf32> to vector<8x384xf32>
    %5 = vector.extract_strided_slice %2 {offsets = [0, 37], sizes = [8, 384], strides = [1, 1]} : vector<8x512xf32> to vector<8x384xf32>
    %6 = vector.extract_strided_slice %2 {offsets = [0, 0], sizes = [8, 384], strides = [1, 1]} : vector<8x512xf32> to vector<8x384xf32>
    %7 = vector.extract_strided_slice %2 {offsets = [0, 2], sizes = [8, 384], strides = [1, 1]} : vector<8x512xf32> to vector<8x384xf32>
    %8 = vector.extract_strided_slice %2 {offsets = [0, 18], sizes = [8, 384], strides = [1, 1]} : vector<8x512xf32> to vector<8x384xf32>
    %9 = vector.extract_strided_slice %2 {offsets = [0, 20], sizes = [8, 384], strides = [1, 1]} : vector<8x512xf32> to vector<8x384xf32>
    %10 = vector.extract_strided_slice %2 {offsets = [0, 36], sizes = [8, 384], strides = [1, 1]} : vector<8x512xf32> to vector<8x384xf32>
    %11 = vector.extract_strided_slice %2 {offsets = [0, 38], sizes = [8, 384], strides = [1, 1]} : vector<8x512xf32> to vector<8x384xf32>
    %c0_3 = arith.constant 0 : index
    %c0_4 = arith.constant 0 : index
    %12 = vector.load %arg3[%c0_3, %c0_4] : memref<1x384xf32, #tpu.memory_space<vmem>>, vector<1x384xf32>
    %cst = arith.constant 0.000000e+00 : f32
    %13 = vector.broadcast %cst : f32 to vector<1x384xf32>
    %14 = arith.cmpf one, %12, %13 : vector<1x384xf32>
    %15 = vector.shape_cast %14 : vector<1x384xi1> to vector<1x384xi1>
    %16 = vector.broadcast %15 : vector<1x384xi1> to vector<8x384xi1>
    %17 = arith.select %16, %8, %6 : vector<8x384xi1>, vector<8x384xf32>
    %18 = vector.shape_cast %14 : vector<1x384xi1> to vector<1x384xi1>
    %19 = vector.broadcast %18 : vector<1x384xi1> to vector<8x384xi1>
    %20 = arith.select %19, %10, %8 : vector<8x384xi1>, vector<8x384xf32>
    %21 = vector.shape_cast %14 : vector<1x384xi1> to vector<1x384xi1>
    %22 = vector.broadcast %21 : vector<1x384xi1> to vector<8x384xi1>
    %23 = arith.select %22, %9, %7 : vector<8x384xi1>, vector<8x384xf32>
    %24 = vector.shape_cast %14 : vector<1x384xi1> to vector<1x384xi1>
    %25 = vector.broadcast %24 : vector<1x384xi1> to vector<8x384xi1>
    %26 = arith.select %25, %11, %9 : vector<8x384xi1>, vector<8x384xf32>
    %27 = tpu.concatenate %3, %4, %5, %17, %20, %23, %26 in 0 : vector<8x384xf32>, vector<8x384xf32>, vector<8x384xf32>, vector<8x384xf32>, vector<8x384xf32>, vector<8x384xf32>, vector<8x384xf32> -> vector<56x384xf32>
    %28 = arith.truncf %27 : vector<56x384xf32> to vector<56x384xbf16>
    %c0_5 = arith.constant 0 : index
    %c0_6 = arith.constant 0 : index
    %29 = vector.load %arg4[%c0_5, %c0_6] : memref<8x56xbf16, #tpu.memory_space<vmem>>, vector<8x56xbf16>
    %cst_7 = arith.constant dense<0.000000e+00> : vector<8x384xf32>
    %30 = tpu.matmul %29, %28, %cst_7 {dimension_numbers = #tpu.dot_dimension_numbers<[1], [0], [0], [1], [0, 0, 1, 1], [], []>} : vector<8x56xbf16>, vector<56x384xbf16>, vector<8x384xf32> -> vector<8x384xf32>
    %c0_8 = arith.constant 0 : index
    %c0_9 = arith.constant 0 : index
    %31 = vector.load %arg5[%c0_8, %c0_9] : memref<8x1xf32, #tpu.memory_space<vmem>>, vector<8x1xf32>
    %32 = vector.broadcast %31 : vector<8x1xf32> to vector<8x384xf32>
    %33 = arith.addf %30, %32 : vector<8x384xf32>
    %34 = arith.addf %33, %4 : vector<8x384xf32>
    %cst_10 = arith.constant 0.000000e+00 : f32
    %35 = vector.broadcast %cst_10 : f32 to vector<8x384xf32>
    %36 = arith.maximumf %34, %35 : vector<8x384xf32>
    %c0_11 = arith.constant 0 : index
    %c0_12 = arith.constant 0 : index
    %37 = vector.load %arg6[%c0_11, %c0_12] : memref<8x384xf32, #tpu.memory_space<vmem>>, vector<8x384xf32>
    tpu.vector_store %arg6[%c0_11, %c0_12], %36 {strides = array<i32>} : memref<8x384xf32, #tpu.memory_space<vmem>>, vector<8x384xf32>,
    return
  }
  func.func @transform_0(%arg0: i32) -> (i32, i32) {
    %c0_i32 = arith.constant 0 : i32
    %c0_i32_0 = arith.constant 0 : i32
    return %c0_i32, %arg0 : i32, i32
  }
  func.func @transform_1(%arg0: i32) -> (i32, i32) {
    %c1_i32 = arith.constant 1 : i32
    %0 = arith.addi %arg0, %c1_i32 : i32
    %c3_i32 = arith.constant 3 : i32
    %1 = arith.muli %0, %c3_i32 : i32
    %c0_i32 = arith.constant 0 : i32
    %c0_i32_0 = arith.constant 0 : i32
    return %c0_i32, %1 : i32, i32
  }
  func.func @transform_2(%arg0: i32) -> (i32, i32) {
    %c0_i32 = arith.constant 0 : i32
    %c0_i32_0 = arith.constant 0 : i32
    return %c0_i32, %arg0 : i32, i32
  }
  func.func @transform_3(%arg0: i32) -> (i32, i32) {
    %c0_i32 = arith.constant 0 : i32
    %c0_i32_0 = arith.constant 0 : i32
    %c0_i32_1 = arith.constant 0 : i32
    return %c0_i32, %c0_i32_0 : i32, i32
  }
  func.func @transform_4(%arg0: i32) -> (i32, i32) {
    %c0_i32 = arith.constant 0 : i32
    %c0_i32_0 = arith.constant 0 : i32
    %c0_i32_1 = arith.constant 0 : i32
    return %c0_i32, %c0_i32_0 : i32, i32
  }
  func.func @transform_5(%arg0: i32) -> (i32, i32) {
    %c0_i32 = arith.constant 0 : i32
    %c0_i32_0 = arith.constant 0 : i32
    return %c0_i32, %arg0 : i32, i32
  }
}

</mosaic_0001>

<llo_original>
// kernel: hex_block_forward.1
$region0: #{hex_block_forward.1}
  #allocation0 [shape = 'u32[]', space=smem, size = 0x4, offset = 0x4, fixed_abs, tag = 'smem constant byte address 0x4 - core index']
  #allocation1 [shape = 'u32[72,128]{1,0:T(1,128)}', space=vmem, size = 0x9000, scoped, tag = 'internal scratch']
  %s0 = inlined_call_operand.vmem [shape: f32[8,896], index: 0, kind: input, shape index: {}, may-alias: {0,1}]
  %s1 = inlined_call_operand.vmem [shape: f32[8,896], index: 1, kind: input, shape index: {}, may-alias: {0,1}]
  %s2 = inlined_call_operand.vmem [shape: f32[1,768], index: 2, kind: input, shape index: {}]
  %s3 = inlined_call_operand.vmem [shape: bf16[8,56], index: 3, kind: input, shape index: {}]
  %s4 = inlined_call_operand.vmem [shape: f32[8,1], index: 4, kind: input, shape index: {}]
  %s5 = inlined_call_operand.vmem [shape: f32[8,768], index: 5, kind: output, shape index: {}]
  %s6 = sld [smem:[#allocation0]]
  $region53: #{hex_block_forward.1} parent=0
    _
  %s8 = ssub.s32 1, %s6
  %s9 = scalar_select 0, %s8, %s6
  loop: start=0, step=1, limit=4
  $region2: #{hex_block_forward.1} parent=0 // loop_pre_header
    _
  $region3: #{hex_block_forward.1} parent=0 // loop_header
    %s11 = sphi 0, %s15
    %p12 = scmp.ge.s32.totalorder %s11, 4
    %s21 = sphi 0, %s23
    %s24 = sphi 0, %s21
    %s25 = sphi 0, %s24
    %s41 = sphi 0, %s25
    %s51 = sphi 0, %s53
    %s54 = sphi 0, %s51
    %s55 = sphi 0, %s54
    %s71 = sphi 0, %s55
    %s77 = sphi 0, %s79
    %s80 = sphi 0, %s77
    %s81 = sphi 0, %s80
    %s97 = sphi 0, %s81
    %s101 = sphi 0, %s101
    %s103 = sphi 0, %s101
    %s104 = sphi 0, %s103
    %s118 = sphi 0, %s104
    %s122 = sphi 0, %s122
    %s124 = sphi 0, %s122
    %s125 = sphi 0, %s124
    %s139 = sphi 0, %s125
    %s145 = sphi 0, %s147
    %s148 = sphi 0, %s145
    %s149 = sphi 0, %s148
    %s165 = sphi 0, %s149
  $region4: #{hex_block_forward.1} parent=0 // loop_header_branch
    %14 = sbr.rel (%p12) target = $region8
  $region5: #{hex_block_forward.1} parent=0 // loop_body
    %s16 = ssub.s32 %s11, 1
    %s17 = ssub.s32 %s11, 2
    %s18 = sadd.s32 %s11, 1
    %s19 = ssub.s32 %s11, %s18
    %p20 = scmp.eq.s32.totalorder %s19, 0
    %s22 = sadd.s32 %s21, 1
    %s23 = scalar_select %p20, %s21, %s22
    %p26 = pneg %p20
    %p27 = scmp.eq.s32.totalorder %s11, 1
    %p28 = por %p26, %p27
    %p29 = scmp.ne.s32.totalorder %s21, %s24
    %p30 = scmp.eq.s32.totalorder %s11, 0
    %p31 = por %p29, %p30
    %p32 = scmp.ne.s32.totalorder %s21, %s24
    %p33 = scmp.eq.s32.totalorder %s16, 1
    %p34 = por %p32, %p33
    %p35 = scmp.ne.s32.totalorder %s24, %s25
    %p36 = scmp.eq.s32.totalorder %s16, 0
    %p37 = por %p35, %p36
    %p38 = scmp.ne.s32.totalorder %s24, %s25
    %p39 = scmp.eq.s32.totalorder %s17, 1
    %p40 = por %p38, %p39
    %p42 = scmp.ne.s32.totalorder %s25, %s41
    %p43 = scmp.eq.s32.totalorder %s17, 0
    %p44 = por %p42, %p43
    %s45 = sadd.s32 %s11, 1
    %s46 = smul.u32 %s45, 3
    %s47 = sadd.s32 %s18, 1
    %s48 = smul.u32 %s47, 3
    %s49 = ssub.s32 %s46, %s48
    %p50 = scmp.eq.s32.totalorder %s49, 0
    %s52 = sadd.s32 %s51, 1
    %s53 = scalar_select %p50, %s51, %s52
    %p56 = pneg %p50
    %p57 = scmp.eq.s32.totalorder %s11, 1
    %p58 = por %p56, %p57
    %p59 = scmp.ne.s32.totalorder %s51, %s54
    %p60 = scmp.eq.s32.totalorder %s11, 0
    %p61 = por %p59, %p60
    %p62 = scmp.ne.s32.totalorder %s51, %s54
    %p63 = scmp.eq.s32.totalorder %s16, 1
    %p64 = por %p62, %p63
    %p65 = scmp.ne.s32.totalorder %s54, %s55
    %p66 = scmp.eq.s32.totalorder %s16, 0
    %p67 = por %p65, %p66
    %p68 = scmp.ne.s32.totalorder %s54, %s55
    %p69 = scmp.eq.s32.totalorder %s17, 1
    %p70 = por %p68, %p69
    %p72 = scmp.ne.s32.totalorder %s55, %s71
    %p73 = scmp.eq.s32.totalorder %s17, 0
    %p74 = por %p72, %p73
    %s75 = ssub.s32 %s11, %s18
    %p76 = scmp.eq.s32.totalorder %s75, 0
    %s78 = sadd.s32 %s77, 1
    %s79 = scalar_select %p76, %s77, %s78
    %p82 = pneg %p76
    %p83 = scmp.eq.s32.totalorder %s11, 1
    %p84 = por %p82, %p83
    %p85 = scmp.ne.s32.totalorder %s77, %s80
    %p86 = scmp.eq.s32.totalorder %s11, 0
    %p87 = por %p85, %p86
    %p88 = scmp.ne.s32.totalorder %s77, %s80
    %p89 = scmp.eq.s32.totalorder %s16, 1
    %p90 = por %p88, %p89
    %p91 = scmp.ne.s32.totalorder %s80, %s81
    %p92 = scmp.eq.s32.totalorder %s16, 0
    %p93 = por %p91, %p92
    %p94 = scmp.ne.s32.totalorder %s80, %s81
    %p95 = scmp.eq.s32.totalorder %s17, 1
    %p96 = por %p94, %p95
    %p98 = scmp.ne.s32.totalorder %s81, %s97
    %p99 = scmp.eq.s32.totalorder %s17, 0
    %p100 = por %p98, %p99
    %s102 = sadd.s32 %s101, 1
    %p105 = scmp.eq.s32.totalorder %s11, 1
    %p106 = scmp.ne.s32.totalorder %s101, %s103
    %p107 = scmp.eq.s32.totalorder %s11, 0
    %p108 = por %p106, %p107
    %p109 = scmp.ne.s32.totalorder %s101, %s103
    %p110 = scmp.eq.s32.totalorder %s16, 1
    %p111 = por %p109, %p110
    %p112 = scmp.ne.s32.totalorder %s103, %s104
    %p113 = scmp.eq.s32.totalorder %s16, 0
    %p114 = por %p112, %p113
    %p115 = scmp.ne.s32.totalorder %s103, %s104
    %p116 = scmp.eq.s32.totalorder %s17, 1
    %p117 = por %p115, %p116
    %p119 = scmp.ne.s32.totalorder %s104, %s118
    %p120 = scmp.eq.s32.totalorder %s17, 0
    %p121 = por %p119, %p120
    %s123 = sadd.s32 %s122, 1
    %p126 = scmp.eq.s32.totalorder %s11, 1
    %p127 = scmp.ne.s32.totalorder %s122, %s124
    %p128 = scmp.eq.s32.totalorder %s11, 0
    %p129 = por %p127, %p128
    %p130 = scmp.ne.s32.totalorder %s122, %s124
    %p131 = scmp.eq.s32.totalorder %s16, 1
    %p132 = por %p130, %p131
    %p133 = scmp.ne.s32.totalorder %s124, %s125
    %p134 = scmp.eq.s32.totalorder %s16, 0
    %p135 = por %p133, %p134
    %p136 = scmp.ne.s32.totalorder %s124, %s125
    %p137 = scmp.eq.s32.totalorder %s17, 1
    %p138 = por %p136, %p137
    %p140 = scmp.ne.s32.totalorder %s125, %s139
    %p141 = scmp.eq.s32.totalorder %s17, 0
    %p142 = por %p140, %p141
    %s143 = ssub.s32 %s11, %s18
    %p144 = scmp.eq.s32.totalorder %s143, 0
    %s146 = sadd.s32 %s145, 1
    %s147 = scalar_select %p144, %s145, %s146
    %p150 = pneg %p144
    %p151 = scmp.eq.s32.totalorder %s11, 1
    %p152 = por %p150, %p151
    %p153 = scmp.ne.s32.totalorder %s145, %s148
    %p154 = scmp.eq.s32.totalorder %s11, 0
    %p155 = por %p153, %p154
    %p156 = scmp.ne.s32.totalorder %s145, %s148
    %p157 = scmp.eq.s32.totalorder %s16, 1
    %p158 = por %p156, %p157
    %p159 = scmp.ne.s32.totalorder %s148, %s149
    %p160 = scmp.eq.s32.totalorder %s16, 0
    %p161 = por %p159, %p160
    %p162 = scmp.ne.s32.totalorder %s148, %s149
    %p163 = scmp.eq.s32.totalorder %s17, 1
    %p164 = por %p162, %p163
    %p166 = scmp.ne.s32.totalorder %s149, %s165
    %p167 = scmp.eq.s32.totalorder %s17, 0
    %p168 = por %p166, %p167
    %p169 = scmp.le.s32.totalorder 1, %s11
    %p170 = scmp.lt.s32.totalorder %s11, 3
    %p171 = pnand %p169, %p170
    %p172 = pneg %p171
    // Predicated region
    $region9: #{hex_block_forward.1} parent=5 // pred_check
      _
    $region10: #{hex_block_forward.1} parent=5 // pred_check_branch
      %174 = sbr.rel (%p171) target = $region12
    $region11: #{hex_block_forward.1} parent=5 // pred_region
      %s175 = ssub.s32 %s11, 1
      // Predicated region
      $region13: #{hex_block_forward.1} parent=11 // pred_check
        %p176 = pneg %p114
      $region14: #{hex_block_forward.1} parent=11 // pred_check_branch
        %178 = sbr.rel (%p176) target = $region16
      $region15: #{hex_block_forward.1} parent=11 // pred_region
        _
      $region16: #{hex_block_forward.1} parent=11 // pred_fallthru
        _
      // Predicated region
      $region17: #{hex_block_forward.1} parent=11 // pred_check
        %p179 = pneg %p135
      $region18: #{hex_block_forward.1} parent=11 // pred_check_branch
        %181 = sbr.rel (%p179) target = $region20
      $region19: #{hex_block_forward.1} parent=11 // pred_region
        _
      $region20: #{hex_block_forward.1} parent=11 // pred_fallthru
        _
    $region12: #{hex_block_forward.1} parent=5 // pred_fallthru
      _
    %p182 = scmp.lt.s32.totalorder %s11, 2
    // Predicated region
    $region21: #{hex_block_forward.1} parent=5 // pred_check
      %p183 = pneg %p182
    $region22: #{hex_block_forward.1} parent=5 // pred_check_branch
      %185 = sbr.rel (%p183) target = $region24
    $region23: #{hex_block_forward.1} parent=5 // pred_region
      // Predicated region
      $region25: #{hex_block_forward.1} parent=23 // pred_check
        %p186 = pneg %p31
      $region26: #{hex_block_forward.1} parent=23 // pred_check_branch
        %188 = sbr.rel (%p186) target = $region28
      $region27: #{hex_block_forward.1} parent=23 // pred_region
        %s189 = smul.u32 3, %s11
        %s190 = ssub.s32 7, %s189
        %p191 = scmp.lt.s32.totalorder %s190, 3
        %s192 = scalar_select %p191, %s190, 3
        %s193 = smul.u32 8, %s192
        %p194 = scmp.lt.s32.totalorder %s189, 6
        %s195 = scalar_select %p194, %s189, 6
        %s196 = smul.addr %s195, 8
        %s197 = scalar_lea.vmem %s0, %s196
        %s198 = smul.u32 3, %s11
        %s199 = ssub.s32 7, %s198
        %p200 = scmp.lt.s32.totalorder %s199, 3
        %s201 = scalar_select %p200, %s199, 3
        %s202 = smul.u32 8, %s201
      $region28: #{hex_block_forward.1} parent=23 // pred_fallthru
        _
      // Predicated region
      $region29: #{hex_block_forward.1} parent=23 // pred_check
        %p203 = pneg %p61
      $region30: #{hex_block_forward.1} parent=23 // pred_check_branch
        %205 = sbr.rel (%p203) target = $region32
      $region31: #{hex_block_forward.1} parent=23 // pred_region
        %s206 = sadd.s32 %s11, 1
        %s207 = smul.u32 %s206, 3
        %p208 = scmp.lt.s32.totalorder %s207, 6
        %s209 = scalar_select %p208, %s207, 6
        %s210 = smul.addr %s209, 8
        %s211 = scalar_lea.vmem %s1, %s210
        %s212 = sadd.s32 %s11, 1
        %s213 = smul.u32 %s212, 3
      $region32: #{hex_block_forward.1} parent=23 // pred_fallthru
        _
      // Predicated region
      $region33: #{hex_block_forward.1} parent=23 // pred_check
        %p214 = pneg %p87
      $region34: #{hex_block_forward.1} parent=23 // pred_check_branch
        %216 = sbr.rel (%p214) target = $region36
      $region35: #{hex_block_forward.1} parent=23 // pred_region
        %s217 = smul.u32 3, %s11
        %p218 = scmp.lt.s32.totalorder %s217, 5
        %s219 = scalar_select %p218, %s217, 5
        %s220 = scalar_lea.vmem %s2, %s219
        %s221 = smul.u32 3, %s11
      $region36: #{hex_block_forward.1} parent=23 // pred_fallthru
        _
    $region24: #{hex_block_forward.1} parent=5 // pred_fallthru
      _
    %p222 = scmp.le.s32.totalorder 1, %s11
    %p223 = scmp.lt.s32.totalorder %s11, 3
    %p224 = pnand %p222, %p223
    %p225 = pneg %p224
    // Predicated region
    $region37: #{hex_block_forward.1} parent=5 // pred_check
      _
    $region38: #{hex_block_forward.1} parent=5 // pred_check_branch
      %227 = sbr.rel (%p224) target = $region40
    $region39: #{hex_block_forward.1} parent=5 // pred_region
      %s228 = ssub.s32 %s11, 1
      %s229 = smul.u32 3, %s16
      %s230 = ssub.s32 7, %s229
      %p231 = scmp.lt.s32.totalorder %s230, 3
      %s232 = scalar_select %p231, %s230, 3
      %s233 = smul.u32 8, %s232
      %p234 = scmp.lt.s32.totalorder %s229, 6
      %s235 = scalar_select %p234, %s229, 6
      %s236 = smul.addr %s235, 8
      %s237 = scalar_lea.vmem %s0, %s236
      %p238 = pneg %p37
      %p239 = pneg %p34
      %s240 = sadd.s32 %s16, 1
      %s241 = smul.u32 %s240, 3
      %p242 = scmp.lt.s32.totalorder %s241, 6
      %s243 = scalar_select %p242, %s241, 6
      %s244 = smul.addr %s243, 8
      %s245 = scalar_lea.vmem %s1, %s244
      %p246 = pneg %p67
      %p247 = pneg %p64
      %s248 = smul.u32 3, %s16
      %p249 = scmp.lt.s32.totalorder %s248, 5
      %s250 = scalar_select %p249, %s248, 5
      %s251 = scalar_lea.vmem %s2, %s250
      %p252 = pneg %p93
      %p253 = pneg %p90
      %p254 = pneg %p114
      %p255 = pneg %p111
      %p256 = pneg %p135
      %p257 = pneg %p132
      %p258 = pneg %p161
      %p259 = pneg %p158
      %s260 = smul.u32 3, %s16
      %p261 = scmp.lt.s32.totalorder %s260, 5
      %s262 = scalar_select %p261, %s260, 5
      %s263 = smul.addr %s262, 8
      %s264 = scalar_lea.vmem %s5, %s263
      %s265 = smul.u32 3, %s16
      %s266 = ssub.s32 7, %s265
      %p267 = scmp.lt.s32.totalorder %s266, 3
      %s268 = scalar_select %p267, %s266, 3
      %s269 = smul.u32 8, %s268
      %p270 = scmp.lt.s32.totalorder %s265, 6
      %s271 = scalar_select %p270, %s265, 6
      %s272 = smul.addr %s271, 8
      %s273 = scalar_lea.vmem %s0, %s272
      %s274 = smul.u32 3, %s16
      %s275 = ssub.s32 7, %s274
      %p276 = scmp.lt.s32.totalorder %s275, 3
      %s277 = scalar_select %p276, %s275, 3
      %s278 = smul.u32 8, %s277
      %s279 = sadd.s32 %s16, 1
      %s280 = smul.u32 %s279, 3
      %p281 = scmp.lt.s32.totalorder %s280, 6
      %s282 = scalar_select %p281, %s280, 6
      %s283 = smul.addr %s282, 8
      %s284 = scalar_lea.vmem %s1, %s283
      %s285 = sadd.s32 %s16, 1
      %s286 = smul.u32 %s285, 3
      %s287 = smul.u32 3, %s16
      %p288 = scmp.lt.s32.totalorder %s287, 5
      %s289 = scalar_select %p288, %s287, 5
      %s290 = scalar_lea.vmem %s2, %s289
      %s291 = smul.u32 3, %s16
      %s292 = smul.u32 3, %s16
      %p293 = scmp.lt.s32.totalorder %s292, 5
      %s294 = scalar_select %p293, %s292, 5
      %s295 = smul.addr %s294, 8
      %s296 = scalar_lea.vmem %s5, %s295
      %s297 = smul.u32 3, %s16
      %v299 = vld [vmem:[%s273] sm:$0xff]
      %v300 = vld [vmem:[%s273 + $0x8] sm:$0xff]
      %v301 = vld [vmem:[%s273 + $0x10] sm:$0xff]
      %v302 = vld [vmem:[%s284] sm:$0xff]
      %v303 = vld [vmem:[%s290] sm:$0x7]
      %vm304 = vcmp.ne.f32.partialorder %v303, 0.0
      %v305 = vsel %vm304, 1, 0
      %v306 = vperm.slane %v305, 0
      %v307 = vperm.slane %v305, 1
      %v308 = vperm.slane %v305, 2
      %vm309 = vcmp.eq.s32.totalorder %v306, 1
      %vm310 = vcmp.eq.s32.totalorder %v307, 1
      %vm311 = vcmp.eq.s32.totalorder %v308, 1
      %316 = vrot.lane.b32.xlu0 %v299, 110
      %v317 = vpop.permute.xlu0 %316
      %318 = vrot.lane.b32.xlu0 %v300, 110
      %v319 = vpop.permute.xlu0 %318
      %320 = vrot.lane.b32.xlu0 %v301, 110
      %v321 = vpop.permute.xlu0 %320
      %322 = vrot.lane.b32.xlu0 %v302, 110
      %v323 = vpop.permute.xlu0 %322
      %vm324 = vcmask 900096
      %v325 = vsel %vm324, %v317, %v319
      %v326 = vsel %vm324, %v319, %v321
      %v327 = vsel %vm324, %v321, %v323
      %v331 = vsel %vm309, %v325, %v299
      %v332 = vsel %vm310, %v326, %v300
      %v333 = vsel %vm311, %v327, %v301
      %334 = vrot.lane.b32.xlu0 %v299, 92
      %v335 = vpop.permute.xlu0 %334
      %336 = vrot.lane.b32.xlu0 %v300, 92
      %v337 = vpop.permute.xlu0 %336
      %338 = vrot.lane.b32.xlu0 %v301, 92
      %v339 = vpop.permute.xlu0 %338
      %340 = vrot.lane.b32.xlu0 %v302, 92
      %v341 = vpop.permute.xlu0 %340
      %vm342 = vcmask 752640
      %v343 = vsel %vm342, %v335, %v337
      %v344 = vsel %vm342, %v337, %v339
      %v345 = vsel %vm342, %v339, %v341
      %v349 = vsel %vm309, %v343, %v325
      %v350 = vsel %vm310, %v344, %v326
      %v351 = vsel %vm311, %v345, %v327
      %352 = vrot.lane.b32.xlu0 %v299, 108
      %v353 = vpop.permute.xlu0 %352
      %354 = vrot.lane.b32.xlu0 %v300, 108
      %v355 = vpop.permute.xlu0 %354
      %356 = vrot.lane.b32.xlu0 %v301, 108
      %v357 = vpop.permute.xlu0 %356
      %358 = vrot.lane.b32.xlu0 %v302, 108
      %v359 = vpop.permute.xlu0 %358
      %vm360 = vcmask 883712
      %v361 = vsel %vm360, %v353, %v355
      %v362 = vsel %vm360, %v355, %v357
      %v363 = vsel %vm360, %v357, %v359
      %367 = vrot.lane.b32.xlu0 %v299, 126
      %v368 = vpop.permute.xlu0 %367
      %369 = vrot.lane.b32.xlu0 %v300, 126
      %v370 = vpop.permute.xlu0 %369
      %371 = vrot.lane.b32.xlu0 %v301, 126
      %v372 = vpop.permute.xlu0 %371
      %373 = vrot.lane.b32.xlu0 %v302, 126
      %v374 = vpop.permute.xlu0 %373
      %vm375 = vcmask 1031168
      %v376 = vsel %vm375, %v368, %v370
      %v377 = vsel %vm375, %v370, %v372
      %v378 = vsel %vm375, %v372, %v374
      %v382 = vsel %vm309, %v361, %v376
      %v383 = vsel %vm310, %v362, %v377
      %v384 = vsel %vm311, %v363, %v378
      %385 = vrot.lane.b32.xlu0 %v299, 90
      %v386 = vpop.permute.xlu0 %385
      %387 = vrot.lane.b32.xlu0 %v300, 90
      %v388 = vpop.permute.xlu0 %387
      %389 = vrot.lane.b32.xlu0 %v301, 90
      %v390 = vpop.permute.xlu0 %389
      %391 = vrot.lane.b32.xlu0 %v302, 90
      %v392 = vpop.permute.xlu0 %391
      %vm393 = vcmask 736256
      %v394 = vsel %vm393, %v386, %v388
      %v395 = vsel %vm393, %v388, %v390
      %v396 = vsel %vm393, %v390, %v392
      %v400 = vsel %vm309, %v394, %v361
      %v401 = vsel %vm310, %v395, %v362
      %v402 = vsel %vm311, %v396, %v363
      %408 = vrot.lane.b32.xlu0 %v331, 1
      %v409 = vpop.permute.xlu0 %408
      %410 = vrot.lane.b32.xlu0 %v332, 1
      %v411 = vpop.permute.xlu0 %410
      %412 = vrot.lane.b32.xlu0 %v333, 1
      %v413 = vpop.permute.xlu0 %412
      %vm414 = vcmask 7168
      %v415 = vsel %vm414, %v409, %v411
      %v416 = vsel %vm414, %v411, %v413
      %424 = vrot.lane.b32.xlu0 %v349, 1
      %v425 = vpop.permute.xlu0 %424
      %426 = vrot.lane.b32.xlu0 %v350, 1
      %v427 = vpop.permute.xlu0 %426
      %428 = vrot.lane.b32.xlu0 %v351, 1
      %v429 = vpop.permute.xlu0 %428
      %v430 = vsel %vm414, %v425, %v427
      %v431 = vsel %vm414, %v427, %v429
      %439 = vrot.lane.b32.xlu0 %v382, 1
      %v440 = vpop.permute.xlu0 %439
      %441 = vrot.lane.b32.xlu0 %v383, 1
      %v442 = vpop.permute.xlu0 %441
      %443 = vrot.lane.b32.xlu0 %v384, 1
      %v444 = vpop.permute.xlu0 %443
      %v445 = vsel %vm414, %v440, %v442
      %v446 = vsel %vm414, %v442, %v444
      %454 = vrot.lane.b32.xlu0 %v400, 1
      %v455 = vpop.permute.xlu0 %454
      %456 = vrot.lane.b32.xlu0 %v401, 1
      %v457 = vpop.permute.xlu0 %456
      %458 = vrot.lane.b32.xlu0 %v402, 1
      %v459 = vpop.permute.xlu0 %458
      %v460 = vsel %vm414, %v455, %v457
      %v461 = vsel %vm414, %v457, %v459
      %v466 = vpack.c.bf16 %v325, %v299
      %v467 = vpack.c.bf16 %v326, %v300
      %v468 = vpack.c.bf16 %v327, %v301
      %v469 = vpack.c.bf16 %v323, %v302
      %v470 = vpack.c.bf16 %v409, %v343
      %v471 = vpack.c.bf16 %v415, %v344
      %v472 = vpack.c.bf16 %v416, %v345
      %v473 = vpack.c.bf16 %v413, %v341
      %v474 = vpack.c.bf16 %v440, %v425
      %v475 = vpack.c.bf16 %v445, %v430
      %v476 = vpack.c.bf16 %v446, %v431
      %v477 = vpack.c.bf16 %v444, %v429
      %v478 = vpack.c.bf16 %v455, %v455
      %v479 = vpack.c.bf16 %v460, %v460
      %v480 = vpack.c.bf16 %v461, %v461
      %v481 = vpack.c.bf16 %v459, %v459
      %v482 = vld [vmem:[%s3] sm:$0xf]
      %v483 = vld [vmem:[%s4] sm:$0xff]
      %485 = vset.pattern.permute.xlu0 0
      %486 = vperm.xlu0 %485, %v483
      %v487 = vpop.permute.xlu0 %486
      %505 = vrot.lane.b32.xlu0 %v466, 127
      %v506 = vpop.permute.xlu0 %505
      %507 = vrot.lane.b32.xlu0 %v467, 127
      %v508 = vpop.permute.xlu0 %507
      %509 = vrot.lane.b32.xlu0 %v468, 127
      %v510 = vpop.permute.xlu0 %509
      %511 = vrot.lane.b32.xlu0 %v469, 127
      %v512 = vpop.permute.xlu0 %511
      %513 = vrot.lane.b32.xlu0 %v470, 127
      %v514 = vpop.permute.xlu0 %513
      %515 = vrot.lane.b32.xlu0 %v471, 127
      %v516 = vpop.permute.xlu0 %515
      %517 = vrot.lane.b32.xlu0 %v472, 127
      %v518 = vpop.permute.xlu0 %517
      %519 = vrot.lane.b32.xlu0 %v473, 127
      %v520 = vpop.permute.xlu0 %519
      %521 = vrot.lane.b32.xlu0 %v474, 127
      %v522 = vpop.permute.xlu0 %521
      %523 = vrot.lane.b32.xlu0 %v475, 127
      %v524 = vpop.permute.xlu0 %523
      %525 = vrot.lane.b32.xlu0 %v476, 127
      %v526 = vpop.permute.xlu0 %525
      %527 = vrot.lane.b32.xlu0 %v477, 127
      %v528 = vpop.permute.xlu0 %527
      %529 = vrot.lane.b32.xlu0 %v478, 127
      %v530 = vpop.permute.xlu0 %529
      %531 = vrot.lane.b32.xlu0 %v479, 127
      %v532 = vpop.permute.xlu0 %531
      %533 = vrot.lane.b32.xlu0 %v480, 127
      %v534 = vpop.permute.xlu0 %533
      %535 = vrot.lane.b32.xlu0 %v481, 127
      %v536 = vpop.permute.xlu0 %535
      %vm537 = vcmask 1039360
      %v538 = vsel %vm537, %v506, %v508
      %v539 = vsel %vm537, %v508, %v510
      %v540 = vsel %vm537, %v510, %v512
      %v541 = vsel %vm537, %v514, %v516
      %v542 = vsel %vm537, %v516, %v518
      %v543 = vsel %vm537, %v518, %v520
      %v544 = vsel %vm537, %v522, %v524
      %v545 = vsel %vm537, %v524, %v526
      %v546 = vsel %vm537, %v526, %v528
      %v547 = vsel %vm537, %v530, %v532
      %v548 = vsel %vm537, %v532, %v534
      %v549 = vsel %vm537, %v534, %v536
      %vm559 = vcmask 457728
      %v561 = vsel %vm559, %v482, 0
      %vm563 = vcmask 1043456
      %v565 = vsel %vm563, %v547, 0
      %v568 = vsel %vm563, %v548, 0
      %v571 = vsel %vm563, %v549, 0
      %573 = vmatpush.bf16.msra.mxu0 0
      %574 = vmatpush.bf16.msra.mxu0 0
      %575 = vmatpush.bf16.msra.mxu0 0
      %576 = vmatpush.bf16.msra.mxu0 0
      %577 = vmatpush.bf16.msra.mxu0 %v565
      %578 = vmatpush.bf16.msra.mxu0 %v544
      %579 = vmatpush.bf16.msra.mxu0 %v541
      %580 = vmatpush.bf16.msra.mxu0 %v538
      %581 = vmatmul.bf16.gmra.mxu0 %v561
      %v582 = vpop.f32.mrf.mxu0
      %v583 = vadd.f32 %v487, %v582
      %v584 = vpop.f32.mrf.mxu0
      %585 = vdwg.mxu0
      %586 = vmatpush.bf16.msra.mxu0 0
      %587 = vmatpush.bf16.msra.mxu0 0
      %588 = vmatpush.bf16.msra.mxu0 0
      %589 = vmatpush.bf16.msra.mxu0 0
      %590 = vmatpush.bf16.msra.mxu0 %v568
      %591 = vmatpush.bf16.msra.mxu0 %v545
      %592 = vmatpush.bf16.msra.mxu0 %v542
      %593 = vmatpush.bf16.msra.mxu0 %v539
      %594 = vmatmul.bf16.gmra.mxu0 %v561
      %v595 = vpop.f32.mrf.mxu0
      %v596 = vadd.f32 %v487, %v595
      %v597 = vpop.f32.mrf.mxu0
      %598 = vdwg.mxu0
      %599 = vmatpush.bf16.msra.mxu0 0
      %600 = vmatpush.bf16.msra.mxu0 0
      %601 = vmatpush.bf16.msra.mxu0 0
      %602 = vmatpush.bf16.msra.mxu0 0
      %603 = vmatpush.bf16.msra.mxu0 %v571
      %604 = vmatpush.bf16.msra.mxu0 %v546
      %605 = vmatpush.bf16.msra.mxu0 %v543
      %606 = vmatpush.bf16.msra.mxu0 %v540
      %607 = vmatmul.bf16.gmra.mxu0 %v561
      %v608 = vpop.f32.mrf.mxu0
      %v609 = vadd.f32 %v487, %v608
      %v610 = vpop.f32.mrf.mxu0
      %611 = vdwg.mxu0
      %612 = vrot.lane.b32.xlu0 %v299, 109
      %v613 = vpop.permute.xlu0 %612
      %614 = vrot.lane.b32.xlu0 %v300, 109
      %v615 = vpop.permute.xlu0 %614
      %616 = vrot.lane.b32.xlu0 %v301, 109
      %v617 = vpop.permute.xlu0 %616
      %618 = vrot.lane.b32.xlu0 %v302, 109
      %v619 = vpop.permute.xlu0 %618
      %vm620 = vcmask 891904
      %v621 = vsel %vm620, %v613, %v615
      %v622 = vsel %vm620, %v615, %v617
      %v623 = vsel %vm620, %v617, %v619
      %v627 = vadd.f32 %v583, %v621
      %v628 = vadd.f32 %v596, %v622
      %v629 = vadd.f32 %v609, %v623
      %v630 = vmax.f32 %v627, 0.0
      %v631 = vmax.f32 %v628, 0.0
      %v632 = vmax.f32 %v629, 0.0
      %633 = vst [vmem:[%s296] sm:$0xff] %v630
      %634 = vst [vmem:[%s296 + $0x8] sm:$0xff] %v631
      %635 = vst [vmem:[%s296 + $0x10] sm:$0xff] %v632
      %s636 = smul.u32 3, %s16
      %p637 = scmp.lt.s32.totalorder %s636, 5
      %s638 = scalar_select %p637, %s636, 5
      %s639 = smul.addr %s638, 8
      %s640 = scalar_lea.vmem %s5, %s639
      // Predicated region
      $region41: #{hex_block_forward.1} parent=39 // pred_check
        %p641 = pneg %p158
      $region42: #{hex_block_forward.1} parent=39 // pred_check_branch
        %643 = sbr.rel (%p641) target = $region44
      $region43: #{hex_block_forward.1} parent=39 // pred_region
        %s644 = smul.u32 3, %s16
      $region44: #{hex_block_forward.1} parent=39 // pred_fallthru
        _
    $region40: #{hex_block_forward.1} parent=5 // pred_fallthru
      _
    %p645 = scmp.le.s32.totalorder 2, %s11
    // Predicated region
    $region45: #{hex_block_forward.1} parent=5 // pred_check
      %p646 = pneg %p645
    $region46: #{hex_block_forward.1} parent=5 // pred_check_branch
      %648 = sbr.rel (%p646) target = $region48
    $region47: #{hex_block_forward.1} parent=5 // pred_region
      %s649 = ssub.s32 %s11, 2
      // Predicated region
      $region49: #{hex_block_forward.1} parent=47 // pred_check
        %p650 = pneg %p164
      $region50: #{hex_block_forward.1} parent=47 // pred_check_branch
        %652 = sbr.rel (%p650) target = $region52
      $region51: #{hex_block_forward.1} parent=47 // pred_region
        %s653 = smul.u32 3, %s17
        %p654 = scmp.lt.s32.totalorder %s653, 5
        %s655 = scalar_select %p654, %s653, 5
        %s656 = smul.addr %s655, 8
        %s657 = scalar_lea.vmem %s5, %s656
      $region52: #{hex_block_forward.1} parent=47 // pred_fallthru
        _
    $region48: #{hex_block_forward.1} parent=5 // pred_fallthru
      _
  $region6: #{hex_block_forward.1} parent=0 // loop_footer
    %s15 = sadd.s32 1, %s11
  $region7: #{hex_block_forward.1} parent=0 // loop_footer_branch
    %10 = sbr.rel target = $region3
  $region8: #{hex_block_forward.1} parent=0 // loop_exit
    _

</llo_original>
